<compile_context>
chip_gen: v6e
topology: v6e:2x2x1
jax: 0.10.0
libtpu: 0.0.40
codegen_flags: <defaults>
</compile_context>

<pallas_src>
import math

import jax
import jax.numpy as jnp
import numpy as np
from jax.experimental import pallas as pl
from jax.experimental.pallas import tpu as pltpu


def _rope_kernel(cos_ref, sin_ref, x_ref, o_ref):
    # x_ref/o_ref blocks are (TS, Dp) (batch dim squeezed), cos/sin are (TS, Dp).
    x = x_ref[...].astype(jnp.float32)
    cos = cos_ref[...]                       # fp32, interleaved (c0,c0,c1,c1,...)
    sin = sin_ref[...]                       # fp32, sign-folded (-s0,s0,-s1,s1,...)
    dp = x.shape[-1]

    # Pair swap: swapped[2i] = x[2i+1], swapped[2i+1] = x[2i].
    # pltpu.roll matches jnp.roll semantics: roll(x, k)[l] = x[l-k].
    x_next = pltpu.roll(x, dp - 1, axis=1)   # x[l+1 (mod Dp)]
    x_prev = pltpu.roll(x, 1, axis=1)        # x[l-1 (mod Dp)]
    lane = jax.lax.broadcasted_iota(jnp.int32, x.shape, 1)
    swapped = jnp.where((lane & 1) == 0, x_next, x_prev)

    # out[2i]   = x[2i]*c_i + x[2i+1]*(-s_i)
    # out[2i+1] = x[2i+1]*c_i + x[2i]*(+s_i)
    o_ref[...] = (x * cos + swapped * sin).astype(o_ref.dtype)


def _pick_tile(sp, dp, itemsize):
    """Largest multiple-of-8 sequence tile that divides sp and fits the budget."""
    # Double-buffered x + out blocks (itemsize each) plus fp32 cos/sin blocks.
    row_bytes = dp * (4 * itemsize + 2 * 4)
    budget = 8 * 1024 * 1024  # comfortable on v5e/v6e (128 MiB) and v7x (64 MiB)
    for ts in (2048, 1024, 512, 256, 128, 64, 32, 16, 8):
        if sp % ts == 0 and ts * row_bytes <= budget:
            return ts
    return sp  # small / awkward Sp: single full-extent block


def sentia_rotary_embedding(x, theta=10000.0):
    """Pallas implementation of SENTIARotaryEmbedding(dim).forward(x)."""
    B, S, D = x.shape
    assert D % 2 == 0
    Dh = D // 2

    # Lane packing factor: fold P consecutive sequence rows into the lane dim
    # so the kernel's last dim is a multiple of 128 (unmasked full-width stores).
    P = 128 // math.gcd(D, 128)
    if S % P != 0:
        P = 1  # correctness-preserving fallback (stores may be masked)
    Sp, Dp = S // P, D * P

    # Frequency tables in fp32 (parameter-free, deterministic construction).
    inv_freq = 1.0 / (theta ** (jnp.arange(0, D, 2, dtype=jnp.float32) / D))
    t = jnp.arange(S, dtype=jnp.float32)
    freqs = t[:, None] * inv_freq[None, :]                       # (S, Dh)
    cos = jnp.repeat(jnp.cos(freqs), 2, axis=-1)                 # (S, D)
    s_half = jnp.sin(freqs)
    sin = jnp.stack((-s_half, s_half), axis=-1).reshape(S, D)    # sign-folded
    cos = cos.reshape(Sp, Dp)
    sin = sin.reshape(Sp, Dp)

    # Free row-major reshape (no data movement): pack P seq rows into lanes.
    xp = x.reshape(B, Sp, Dp)

    TS = _pick_tile(Sp, Dp, jnp.dtype(x.dtype).itemsize)
    grid = (Sp // TS, B)  # batch innermost -> cos/sin blocks reused across B

    fspec = pl.BlockSpec((TS, Dp), lambda s, b: (s, 0))
    xspec = pl.BlockSpec((None, TS, Dp), lambda s, b: (b, s, 0))

    out = pl.pallas_call(
        _rope_kernel,
        out_shape=jax.ShapeDtypeStruct((B, Sp, Dp), x.dtype),
        grid_spec=pltpu.PrefetchScalarGridSpec(
            num_scalar_prefetch=0,
            grid=grid,
            in_specs=[fspec, fspec, xspec],
            out_specs=xspec,
        ),
        compiler_params=pltpu.CompilerParams(
            dimension_semantics=("parallel", "parallel")),
    )(cos, sin, xp)

    return out.reshape(B, S, D)


def _rope_reference(x, theta=10000.0):
    """Pure numpy reference reproducing rotary_embedding_torch semantics."""
    x = np.asarray(x, dtype=np.float32)
    B, S, D = x.shape
    inv_freq = 1.0 / (theta ** (np.arange(0, D, 2, dtype=np.float32) / D))
    t = np.arange(S, dtype=np.float32)
    freqs = np.einsum("i,j->ij", t, inv_freq)         # (S, D/2)
    freqs = np.repeat(freqs, 2, axis=-1)              # (S, D) interleaved
    cos, sin = np.cos(freqs), np.sin(freqs)
    xr = x.reshape(B, S, D // 2, 2)
    x1, x2 = xr[..., 0], xr[..., 1]
    rot = np.stack((-x2, x1), axis=-1).reshape(B, S, D)
    return x * cos + rot * sin


if __name__ == "__main__":
    key = jax.random.PRNGKey(0)
    B, S, D = 2, 8, 64
    x = jax.random.normal(key, (B, S, D), dtype=jnp.float32)

    fn = jax.jit(sentia_rotary_embedding)
    out = jax.block_until_ready(fn(x))

    ref = _rope_reference(x)
    np.testing.assert_allclose(np.asarray(out), ref, rtol=1e-5, atol=1e-5)

    print("KERNEL_OK")
</pallas_src>

<mosaic_0001>
module attributes {stable_mosaic.version = 11 : i64} {
  func.func @_rope_kernel(%arg0: i32, %arg1: i32, %arg2: memref<4x128xf32, #tpu.memory_space<vmem>>, %arg3: memref<4x128xf32, #tpu.memory_space<vmem>>, %arg4: memref<1x4x128xf32, #tpu.memory_space<vmem>>, %arg5: memref<1x4x128xf32, #tpu.memory_space<vmem>>) attributes {dimension_semantics = [#tpu.dimension_semantics<parallel>, #tpu.dimension_semantics<parallel>], iteration_bounds = array<i64: 1, 2>, scalar_prefetch = 0 : i64, scratch_operands = 0 : i64, tpu.core_type = #tpu.core_type<tc>, window_params = [{transform_indices = @transform_0, window_bounds = array<i64: 4, 128>}, {transform_indices = @transform_1, window_bounds = array<i64: 4, 128>}, {transform_indices = @transform_2, window_bounds = array<i64: 1, 4, 128>}, {transform_indices = @transform_3, window_bounds = array<i64: 1, 4, 128>}]} {
    %c0 = arith.constant 0 : index
    %c0_0 = arith.constant 0 : index
    %c0_1 = arith.constant 0 : index
    %0 = vector.load %arg4[%c0, %c0_0, %c0_1] : memref<1x4x128xf32, #tpu.memory_space<vmem>>, vector<1x4x128xf32>
    %1 = vector.shape_cast %0 : vector<1x4x128xf32> to vector<4x128xf32>
    %c0_2 = arith.constant 0 : index
    %c0_3 = arith.constant 0 : index
    %2 = vector.load %arg2[%c0_2, %c0_3] : memref<4x128xf32, #tpu.memory_space<vmem>>, vector<4x128xf32>
    %c0_4 = arith.constant 0 : index
    %c0_5 = arith.constant 0 : index
    %3 = vector.load %arg3[%c0_4, %c0_5] : memref<4x128xf32, #tpu.memory_space<vmem>>, vector<4x128xf32>
    %c127_i32 = arith.constant 127 : i32
    %4 = tpu.dynamic_rotate %1 by %c127_i32 dim 1 : vector<4x128xf32>, i32 -> vector<4x128xf32>
    %c1_i32 = arith.constant 1 : i32
    %5 = tpu.dynamic_rotate %1 by %c1_i32 dim 1 : vector<4x128xf32>, i32 -> vector<4x128xf32>
    %6 = tpu.iota {dimensions = array<i32: 1>} : vector<4x128xi32>
    %c1_i32_6 = arith.constant 1 : i32
    %7 = vector.broadcast %c1_i32_6 : i32 to vector<4x128xi32>
    %8 = arith.andi %6, %7 : vector<4x128xi32>
    %c0_i32 = arith.constant 0 : i32
    %9 = vector.broadcast %c0_i32 : i32 to vector<4x128xi32>
    %10 = arith.cmpi eq, %8, %9 : vector<4x128xi32>
    %11 = arith.select %10, %4, %5 : vector<4x128xi1>, vector<4x128xf32>
    %12 = arith.mulf %1, %2 : vector<4x128xf32>
    %13 = arith.mulf %11, %3 : vector<4x128xf32>
    %14 = arith.addf %12, %13 : vector<4x128xf32>
    %c0_7 = arith.constant 0 : index
    %c0_8 = arith.constant 0 : index
    %c0_9 = arith.constant 0 : index
    %15 = vector.load %arg5[%c0_7, %c0_8, %c0_9] : memref<1x4x128xf32, #tpu.memory_space<vmem>>, vector<1x4x128xf32>
    %16 = vector.shape_cast %15 : vector<1x4x128xf32> to vector<4x128xf32>
    %17 = vector.shape_cast %14 : vector<4x128xf32> to vector<1x4x128xf32>
    tpu.vector_store %arg5[%c0_7, %c0_8, %c0_9], %17 {strides = array<i32>} : memref<1x4x128xf32, #tpu.memory_space<vmem>>, vector<1x4x128xf32>,
    return
  }
  func.func @transform_0(%arg0: i32, %arg1: i32) -> (i32, i32) {
    %c0_i32 = arith.constant 0 : i32
    %c0_i32_0 = arith.constant 0 : i32
    return %arg0, %c0_i32 : i32, i32
  }
  func.func @transform_1(%arg0: i32, %arg1: i32) -> (i32, i32) {
    %c0_i32 = arith.constant 0 : i32
    %c0_i32_0 = arith.constant 0 : i32
    return %arg0, %c0_i32 : i32, i32
  }
  func.func @transform_2(%arg0: i32, %arg1: i32) -> (i32, i32, i32) {
    %c0_i32 = arith.constant 0 : i32
    %c0_i32_0 = arith.constant 0 : i32
    return %arg1, %arg0, %c0_i32 : i32, i32, i32
  }
  func.func @transform_3(%arg0: i32, %arg1: i32) -> (i32, i32, i32) {
    %c0_i32 = arith.constant 0 : i32
    %c0_i32_0 = arith.constant 0 : i32
    return %arg1, %arg0, %c0_i32 : i32, i32, i32
  }
}

</mosaic_0001>

<llo_original>
// kernel: sentia_rotary_embedding.1
$region0: #{sentia_rotary_embedding.1}
  #allocation0 [shape = 'u32[]', space=smem, size = 0x4, offset = 0x4, fixed_abs, tag = 'smem constant byte address 0x4 - core index']
  #allocation1 [shape = 'u32[144,128]{1,0:T(1,128)}', space=vmem, size = 0x12000, scoped, tag = 'internal scratch']
  %s0 = inlined_call_operand.vmem [shape: f32[4,128], index: 0, kind: input, shape index: {}]
  %s1 = inlined_call_operand.vmem [shape: f32[4,128], index: 1, kind: input, shape index: {}]
  %s2 = inlined_call_operand.vmem [shape: f32[2,4,128], index: 2, kind: input, shape index: {}]
  %s3 = inlined_call_operand.vmem [shape: f32[2,4,128], index: 3, kind: output, shape index: {}]
  %s4 = sld [smem:[#allocation0]]
  $region45: #{sentia_rotary_embedding.1} parent=0
    _
  %s6 = ssub.s32 1, %s4
  %s7 = scalar_select 0, %s6, %s4
  loop: start=0, step=1, limit=4
  $region2: #{sentia_rotary_embedding.1} parent=0 // loop_pre_header
    _
  $region3: #{sentia_rotary_embedding.1} parent=0 // loop_header
    %s9 = sphi 0, %s13
    %p10 = scmp.ge.s32.totalorder %s9, 4
    %s16 = sphi 0, %s28
    %s17 = sphi 0, %s24
    %s18 = sphi 0, %s16
    %s19 = sphi 0, %s17
    %s20 = sphi 0, %s18
    %s21 = sphi 0, %s19
    %s31 = sphi 0, %s33
    %s34 = sphi 0, %s31
    %s35 = sphi 0, %s34
    %s51 = sphi 0, %s35
    %s57 = sphi 0, %s59
    %s60 = sphi 0, %s57
    %s61 = sphi 0, %s60
    %s77 = sphi 0, %s61
    %s85 = sphi 0, %s87
    %s88 = sphi 0, %s85
    %s89 = sphi 0, %s88
    %s105 = sphi 0, %s89
    %s113 = sphi 0, %s115
    %s116 = sphi 0, %s113
    %s117 = sphi 0, %s116
    %s133 = sphi 0, %s117
  $region4: #{sentia_rotary_embedding.1} parent=0 // loop_header_branch
    %12 = sbr.rel (%p10) target = $region8
  $region5: #{sentia_rotary_embedding.1} parent=0 // loop_body
    %s14 = ssub.s32 %s9, 1
    %s15 = ssub.s32 %s9, 2
    %s22 = sadd.s32 1, %s17
    %p23 = scmp.ge.s32.totalorder %s22, 2
    %s24 = scalar_select %p23, 0, %s22
    %s25 = sadd.s32 1, %s16
    %s26 = scalar_select %p23, %s25, %s16
    %p27 = scmp.ge.s32.totalorder %s26, 1
    %s28 = scalar_select %p27, 0, %s26
    %s29 = ssub.s32 %s16, %s28
    %p30 = scmp.eq.s32.totalorder %s29, 0
    %s32 = sadd.s32 %s31, 1
    %s33 = scalar_select %p30, %s31, %s32
    %p36 = pneg %p30
    %p37 = scmp.eq.s32.totalorder %s9, 1
    %p38 = por %p36, %p37
    %p39 = scmp.ne.s32.totalorder %s31, %s34
    %p40 = scmp.eq.s32.totalorder %s9, 0
    %p41 = por %p39, %p40
    %p42 = scmp.ne.s32.totalorder %s31, %s34
    %p43 = scmp.eq.s32.totalorder %s14, 1
    %p44 = por %p42, %p43
    %p45 = scmp.ne.s32.totalorder %s34, %s35
    %p46 = scmp.eq.s32.totalorder %s14, 0
    %p47 = por %p45, %p46
    %p48 = scmp.ne.s32.totalorder %s34, %s35
    %p49 = scmp.eq.s32.totalorder %s15, 1
    %p50 = por %p48, %p49
    %p52 = scmp.ne.s32.totalorder %s35, %s51
    %p53 = scmp.eq.s32.totalorder %s15, 0
    %p54 = por %p52, %p53
    %s55 = ssub.s32 %s16, %s28
    %p56 = scmp.eq.s32.totalorder %s55, 0
    %s58 = sadd.s32 %s57, 1
    %s59 = scalar_select %p56, %s57, %s58
    %p62 = pneg %p56
    %p63 = scmp.eq.s32.totalorder %s9, 1
    %p64 = por %p62, %p63
    %p65 = scmp.ne.s32.totalorder %s57, %s60
    %p66 = scmp.eq.s32.totalorder %s9, 0
    %p67 = por %p65, %p66
    %p68 = scmp.ne.s32.totalorder %s57, %s60
    %p69 = scmp.eq.s32.totalorder %s14, 1
    %p70 = por %p68, %p69
    %p71 = scmp.ne.s32.totalorder %s60, %s61
    %p72 = scmp.eq.s32.totalorder %s14, 0
    %p73 = por %p71, %p72
    %p74 = scmp.ne.s32.totalorder %s60, %s61
    %p75 = scmp.eq.s32.totalorder %s15, 1
    %p76 = por %p74, %p75
    %p78 = scmp.ne.s32.totalorder %s61, %s77
    %p79 = scmp.eq.s32.totalorder %s15, 0
    %p80 = por %p78, %p79
    %s81 = ssub.s32 %s17, %s24
    %s82 = ssub.s32 %s16, %s28
    %s83 = sor.u32 %s81, %s82
    %p84 = scmp.eq.s32.totalorder %s83, 0
    %s86 = sadd.s32 %s85, 1
    %s87 = scalar_select %p84, %s85, %s86
    %p90 = pneg %p84
    %p91 = scmp.eq.s32.totalorder %s9, 1
    %p92 = por %p90, %p91
    %p93 = scmp.ne.s32.totalorder %s85, %s88
    %p94 = scmp.eq.s32.totalorder %s9, 0
    %p95 = por %p93, %p94
    %p96 = scmp.ne.s32.totalorder %s85, %s88
    %p97 = scmp.eq.s32.totalorder %s14, 1
    %p98 = por %p96, %p97
    %p99 = scmp.ne.s32.totalorder %s88, %s89
    %p100 = scmp.eq.s32.totalorder %s14, 0
    %p101 = por %p99, %p100
    %p102 = scmp.ne.s32.totalorder %s88, %s89
    %p103 = scmp.eq.s32.totalorder %s15, 1
    %p104 = por %p102, %p103
    %p106 = scmp.ne.s32.totalorder %s89, %s105
    %p107 = scmp.eq.s32.totalorder %s15, 0
    %p108 = por %p106, %p107
    %s109 = ssub.s32 %s17, %s24
    %s110 = ssub.s32 %s16, %s28
    %s111 = sor.u32 %s109, %s110
    %p112 = scmp.eq.s32.totalorder %s111, 0
    %s114 = sadd.s32 %s113, 1
    %s115 = scalar_select %p112, %s113, %s114
    %p118 = pneg %p112
    %p119 = scmp.eq.s32.totalorder %s9, 1
    %p120 = por %p118, %p119
    %p121 = scmp.ne.s32.totalorder %s113, %s116
    %p122 = scmp.eq.s32.totalorder %s9, 0
    %p123 = por %p121, %p122
    %p124 = scmp.ne.s32.totalorder %s113, %s116
    %p125 = scmp.eq.s32.totalorder %s14, 1
    %p126 = por %p124, %p125
    %p127 = scmp.ne.s32.totalorder %s116, %s117
    %p128 = scmp.eq.s32.totalorder %s14, 0
    %p129 = por %p127, %p128
    %p130 = scmp.ne.s32.totalorder %s116, %s117
    %p131 = scmp.eq.s32.totalorder %s15, 1
    %p132 = por %p130, %p131
    %p134 = scmp.ne.s32.totalorder %s117, %s133
    %p135 = scmp.eq.s32.totalorder %s15, 0
    %p136 = por %p134, %p135
    %p137 = scmp.le.s32.totalorder 1, %s9
    %p138 = scmp.lt.s32.totalorder %s9, 3
    %p139 = pnand %p137, %p138
    %p140 = pneg %p139
    // Predicated region
    $region9: #{sentia_rotary_embedding.1} parent=5 // pred_check
      _
    $region10: #{sentia_rotary_embedding.1} parent=5 // pred_check_branch
      %142 = sbr.rel (%p139) target = $region12
    $region11: #{sentia_rotary_embedding.1} parent=5 // pred_region
      %s143 = ssub.s32 %s9, 1
      // Predicated region
      $region13: #{sentia_rotary_embedding.1} parent=11 // pred_check
        %p144 = pneg %p47
      $region14: #{sentia_rotary_embedding.1} parent=11 // pred_check_branch
        %146 = sbr.rel (%p144) target = $region16
      $region15: #{sentia_rotary_embedding.1} parent=11 // pred_region
        %p147 = scmp.lt.s32.totalorder %s18, 0
        %s148 = scalar_select %p147, %s18, 0
        %s149 = smul.addr %s148, 4
        %s150 = scalar_lea.vmem %s0, %s149
      $region16: #{sentia_rotary_embedding.1} parent=11 // pred_fallthru
        _
      // Predicated region
      $region17: #{sentia_rotary_embedding.1} parent=11 // pred_check
        %p151 = pneg %p73
      $region18: #{sentia_rotary_embedding.1} parent=11 // pred_check_branch
        %153 = sbr.rel (%p151) target = $region20
      $region19: #{sentia_rotary_embedding.1} parent=11 // pred_region
        %p154 = scmp.lt.s32.totalorder %s18, 0
        %s155 = scalar_select %p154, %s18, 0
        %s156 = smul.addr %s155, 4
        %s157 = scalar_lea.vmem %s1, %s156
      $region20: #{sentia_rotary_embedding.1} parent=11 // pred_fallthru
        _
    $region12: #{sentia_rotary_embedding.1} parent=5 // pred_fallthru
      _
    %p158 = scmp.lt.s32.totalorder %s9, 2
    // Predicated region
    $region21: #{sentia_rotary_embedding.1} parent=5 // pred_check
      %p159 = pneg %p158
    $region22: #{sentia_rotary_embedding.1} parent=5 // pred_check_branch
      %161 = sbr.rel (%p159) target = $region24
    $region23: #{sentia_rotary_embedding.1} parent=5 // pred_region
      // Predicated region
      $region25: #{sentia_rotary_embedding.1} parent=23 // pred_check
        %p162 = pneg %p95
      $region26: #{sentia_rotary_embedding.1} parent=23 // pred_check_branch
        %164 = sbr.rel (%p162) target = $region28
      $region27: #{sentia_rotary_embedding.1} parent=23 // pred_region
        %p165 = scmp.lt.s32.totalorder %s17, 1
        %s166 = scalar_select %p165, %s17, 1
        %p167 = scmp.lt.s32.totalorder %s16, 0
        %s168 = scalar_select %p167, %s16, 0
        %s169 = sadd.s32 %s168, %s166
        %s170 = smul.addr %s169, 4
        %s171 = scalar_lea.vmem %s2, %s170
      $region28: #{sentia_rotary_embedding.1} parent=23 // pred_fallthru
        _
    $region24: #{sentia_rotary_embedding.1} parent=5 // pred_fallthru
      _
    %p172 = scmp.le.s32.totalorder 1, %s9
    %p173 = scmp.lt.s32.totalorder %s9, 3
    %p174 = pnand %p172, %p173
    %p175 = pneg %p174
    // Predicated region
    $region29: #{sentia_rotary_embedding.1} parent=5 // pred_check
      _
    $region30: #{sentia_rotary_embedding.1} parent=5 // pred_check_branch
      %177 = sbr.rel (%p174) target = $region32
    $region31: #{sentia_rotary_embedding.1} parent=5 // pred_region
      %s178 = ssub.s32 %s9, 1
      %p179 = scmp.lt.s32.totalorder %s18, 0
      %s180 = scalar_select %p179, %s18, 0
      %s181 = smul.addr %s180, 4
      %s182 = scalar_lea.vmem %s0, %s181
      %p183 = pneg %p47
      %p184 = pneg %p44
      %p185 = scmp.lt.s32.totalorder %s18, 0
      %s186 = scalar_select %p185, %s18, 0
      %s187 = smul.addr %s186, 4
      %s188 = scalar_lea.vmem %s1, %s187
      %p189 = pneg %p73
      %p190 = pneg %p70
      %p191 = scmp.lt.s32.totalorder %s19, 1
      %s192 = scalar_select %p191, %s19, 1
      %p193 = scmp.lt.s32.totalorder %s18, 0
      %s194 = scalar_select %p193, %s18, 0
      %s195 = sadd.s32 %s194, %s192
      %s196 = smul.addr %s195, 4
      %s197 = scalar_lea.vmem %s2, %s196
      %p198 = pneg %p101
      %p199 = pneg %p98
      %p200 = pneg %p129
      %p201 = pneg %p126
      %p202 = scmp.lt.s32.totalorder %s19, 1
      %s203 = scalar_select %p202, %s19, 1
      %p204 = scmp.lt.s32.totalorder %s18, 0
      %s205 = scalar_select %p204, %s18, 0
      %s206 = sadd.s32 %s205, %s203
      %s207 = smul.addr %s206, 4
      %s208 = scalar_lea.vmem %s3, %s207
      %p209 = scmp.lt.s32.totalorder %s18, 0
      %s210 = scalar_select %p209, %s18, 0
      %s211 = smul.addr %s210, 4
      %s212 = scalar_lea.vmem %s0, %s211
      %p213 = scmp.lt.s32.totalorder %s18, 0
      %s214 = scalar_select %p213, %s18, 0
      %s215 = smul.addr %s214, 4
      %s216 = scalar_lea.vmem %s1, %s215
      %p217 = scmp.lt.s32.totalorder %s19, 1
      %s218 = scalar_select %p217, %s19, 1
      %p219 = scmp.lt.s32.totalorder %s18, 0
      %s220 = scalar_select %p219, %s18, 0
      %s221 = sadd.s32 %s220, %s218
      %s222 = smul.addr %s221, 4
      %s223 = scalar_lea.vmem %s2, %s222
      %p224 = scmp.lt.s32.totalorder %s19, 1
      %s225 = scalar_select %p224, %s19, 1
      %p226 = scmp.lt.s32.totalorder %s18, 0
      %s227 = scalar_select %p226, %s18, 0
      %s228 = sadd.s32 %s227, %s225
      %s229 = smul.addr %s228, 4
      %s230 = scalar_lea.vmem %s3, %s229
      %v231 = vld [vmem:[%s223] sm:$0xf]
      %v232 = vld [vmem:[%s212] sm:$0xf]
      %v233 = vld [vmem:[%s216] sm:$0xf]
      %234 = vrot.lane.b32.xlu0 %v231, 127
      %v235 = vpop.permute.xlu0 %234
      %236 = vrot.lane.b32.xlu0 %v231, 1
      %v237 = vpop.permute.xlu0 %236
      %v238 = vlaneseq
      %v239 = vand.u32 %v238, 127
      %v240 = vand.u32 %v239, 1
      %vm241 = vcmp.eq.s32.totalorder %v240, 0
      %v242 = vsel %vm241, %v235, %v237
      %v243 = vmul.f32 %v231, %v232
      %v244 = vmul.f32 %v242, %v233
      %v245 = vadd.f32 %v243, %v244
      %246 = vst [vmem:[%s230] sm:$0xf] %v245
      %p247 = scmp.lt.s32.totalorder %s19, 1
      %s248 = scalar_select %p247, %s19, 1
      %p249 = scmp.lt.s32.totalorder %s18, 0
      %s250 = scalar_select %p249, %s18, 0
      %s251 = sadd.s32 %s250, %s248
      %s252 = smul.addr %s251, 4
      %s253 = scalar_lea.vmem %s3, %s252
      // Predicated region
      $region33: #{sentia_rotary_embedding.1} parent=31 // pred_check
        %p254 = pneg %p126
      $region34: #{sentia_rotary_embedding.1} parent=31 // pred_check_branch
        %256 = sbr.rel (%p254) target = $region36
      $region35: #{sentia_rotary_embedding.1} parent=31 // pred_region
        _
      $region36: #{sentia_rotary_embedding.1} parent=31 // pred_fallthru
        _
    $region32: #{sentia_rotary_embedding.1} parent=5 // pred_fallthru
      _
    %p257 = scmp.le.s32.totalorder 2, %s9
    // Predicated region
    $region37: #{sentia_rotary_embedding.1} parent=5 // pred_check
      %p258 = pneg %p257
    $region38: #{sentia_rotary_embedding.1} parent=5 // pred_check_branch
      %260 = sbr.rel (%p258) target = $region40
    $region39: #{sentia_rotary_embedding.1} parent=5 // pred_region
      %s261 = ssub.s32 %s9, 2
      // Predicated region
      $region41: #{sentia_rotary_embedding.1} parent=39 // pred_check
        %p262 = pneg %p132
      $region42: #{sentia_rotary_embedding.1} parent=39 // pred_check_branch
        %264 = sbr.rel (%p262) target = $region44
      $region43: #{sentia_rotary_embedding.1} parent=39 // pred_region
        %p265 = scmp.lt.s32.totalorder %s21, 1
        %s266 = scalar_select %p265, %s21, 1
        %p267 = scmp.lt.s32.totalorder %s20, 0
        %s268 = scalar_select %p267, %s20, 0
        %s269 = sadd.s32 %s268, %s266
        %s270 = smul.addr %s269, 4
        %s271 = scalar_lea.vmem %s3, %s270
      $region44: #{sentia_rotary_embedding.1} parent=39 // pred_fallthru
        _
    $region40: #{sentia_rotary_embedding.1} parent=5 // pred_fallthru
      _
  $region6: #{sentia_rotary_embedding.1} parent=0 // loop_footer
    %s13 = sadd.s32 1, %s9
  $region7: #{sentia_rotary_embedding.1} parent=0 // loop_footer_branch
    %8 = sbr.rel target = $region3
  $region8: #{sentia_rotary_embedding.1} parent=0 // loop_exit
    _

</llo_original>
